<compile_context>
chip_gen: v6e
topology: v6e:2x2x1
jax: 0.10.0
libtpu: 0.0.40
codegen_flags: <defaults>
</compile_context>

<pallas_src>
import functools

import jax
import jax.numpy as jnp
from jax.experimental import pallas as pl
from jax.experimental.pallas import tpu as pltpu


# ----------------------------- Pallas kernel --------------------------------

def _lstm_unit1_kernel(x_ref, wf_ref, bf_ref, wmix_ref, bmix_ref, out_ref):
    # x_ref:    (L*B, F)   rows ordered (l, b) -- free row-major view of the (L, B, F) input
    # wf_ref:   (F, F)     fused encoder∘decoder weight  (W_enc @ W_dec)
    # bf_ref:   (1, F)     fused encoder∘decoder bias    (b_enc @ W_dec + b_dec)
    # wmix_ref: (B*P, L*B) block-diagonal time-mix operator (built in the wrapper)
    # bmix_ref: (B*P, 1)   time-mix bias, repeated per batch
    # out_ref:  (B*P, F)   rows ordered (b, p) -- free row-major view of the (B, P, F) output
    dec = jnp.dot(x_ref[...], wf_ref[...],
                  preferred_element_type=jnp.float32) + bf_ref[...]          # (L*B, F)
    y = jnp.dot(wmix_ref[...], dec,
                preferred_element_type=jnp.float32) + bmix_ref[...]          # (B*P, F)
    out_ref[...] = y.astype(out_ref.dtype)


# ------------------------------- wrapper -------------------------------------

def lstm_unit1_forward(x, params):
    """x: (L, B, F) float32 -> (B, pred_len, F), matching LSTMUnit1.forward."""
    L, B, F = x.shape
    P, Lw = params["W_out"].shape
    assert Lw == L, "input_len of the `out` Linear must equal the sequence length"

    # ---- wrapper-side weight preparation (constant-folded under jit when params are
    # closure constants; a few KB of XLA work even when traced) ------------------------
    # encoder∘decoder fusion: no activation between the two Linears in the module.
    w_fused = params["W_enc"] @ params["W_dec"]                        # (F, F)
    b_fused = params["b_enc"] @ params["W_dec"] + params["b_dec"]      # (1, F)
    # Block-diagonal time-mix operator:
    #   w_mix[b*P + p, l*B + c] = W_out[p, l] * delta(b, c)
    # so that  w_mix @ x.reshape(L*B, F)  computes  sum_l W_out[p, l] * x[l, b, :]
    # for every (b, p) row -- one 2-D MXU matmul, no in-kernel reshape/transpose.
    eye_b = jnp.eye(B, dtype=x.dtype)
    w_mix = jnp.einsum("pl,bc->bplc", params["W_out"], eye_b).reshape(B * P, L * B)
    b_mix = jnp.tile(params["b_out"], (B, 1))                          # (B*P, 1)

    # Row-major collapse (L, B, F) -> (L*B, F): a bitcast view, NOT a transpose -> no
    # extra HBM traffic before the kernel reads x.
    x2d = x.reshape(L * B, F)

    out2d = pl.pallas_call(
        _lstm_unit1_kernel,
        grid=(1,),   # single step: whole problem (a few KB) resident in VMEM
        in_specs=[
            pl.BlockSpec((L * B, F), lambda i: (0, 0)),       # activations
            pl.BlockSpec((F, F), lambda i: (0, 0)),           # fused enc∘dec weight
            pl.BlockSpec((1, F), lambda i: (0, 0)),           # fused enc∘dec bias
            pl.BlockSpec((B * P, L * B), lambda i: (0, 0)),   # block-diag time-mix weight
            pl.BlockSpec((B * P, 1), lambda i: (0, 0)),       # time-mix bias
        ],
        out_specs=pl.BlockSpec((B * P, F), lambda i: (0, 0)),
        out_shape=jax.ShapeDtypeStruct((B * P, F), x.dtype),
        compiler_params=pltpu.CompilerParams(
            dimension_semantics=("arbitrary",)),   # single step; no megacore split
    )(x2d, w_fused, b_fused, w_mix, b_mix)

    # Row-major split (B*P, F) -> (B, P, F): free bitcast, already in final orientation.
    return out2d.reshape(B, P, F)


# ------------------------- parameter initialization -------------------------

def init_params(key, features, hidden_size, input_len, pred_len):
    """Deterministic synthetic parameters (uniform +-1/sqrt(fan_in), like PyTorch)."""
    def unif(k, shape, bound):
        return jax.random.uniform(k, shape, jnp.float32, -bound, bound)

    keys = jax.random.split(key, 6)
    k_enc = 1.0 / jnp.sqrt(features)
    k_dec = 1.0 / jnp.sqrt(hidden_size)
    k_out = 1.0 / jnp.sqrt(input_len)
    return {
        "W_enc": unif(keys[0], (features, hidden_size), k_enc),   # torch weight, transposed
        "b_enc": unif(keys[1], (1, hidden_size), k_enc),
        "W_dec": unif(keys[2], (hidden_size, features), k_dec),
        "b_dec": unif(keys[3], (1, features), k_dec),
        "W_out": unif(keys[4], (pred_len, input_len), k_out),     # torch (out, in) layout
        "b_out": unif(keys[5], (pred_len, 1), k_out),
    }


# ------------------------------ JAX reference --------------------------------

def reference_forward(x, params):
    """Literal translation of LSTMUnit1.forward (encoder -> decoder -> time-mix Linear)."""
    L, B, F = x.shape
    hp = jax.lax.Precision.HIGHEST
    h = jnp.matmul(x.reshape(L * B, F), params["W_enc"], precision=hp) + params["b_enc"]
    d = jnp.matmul(h, params["W_dec"], precision=hp) + params["b_dec"]
    d = d.reshape(L, B, F)
    d_perm = jnp.transpose(d, (1, 2, 0))                                       # (B, F, L)
    y = jnp.matmul(d_perm, params["W_out"].T, precision=hp) + params["b_out"][:, 0]
    return jnp.transpose(y, (0, 2, 1))                                         # (B, P, F)


# ---------------------------------- main -------------------------------------

if __name__ == "__main__":
    features, hidden_size = 8, 32
    input_len, pred_len = 26, 6       # module defaults
    L, B = input_len, 4

    key = jax.random.PRNGKey(0)
    k_x, k_p = jax.random.split(key)

    x = jax.random.normal(k_x, (L, B, features), jnp.float32)
    params = init_params(k_p, features, hidden_size, input_len, pred_len)

    fwd = jax.jit(functools.partial(lstm_unit1_forward, params=params))
    out = jax.block_until_ready(fwd(x))

    ref = reference_forward(x, params)

    assert out.shape == (B, pred_len, features), out.shape
    # Slightly relaxed tolerance: the enc∘dec algebraic fusion changes f32 rounding order.
    assert jnp.allclose(out, ref, atol=2e-5, rtol=2e-5), float(jnp.max(jnp.abs(out - ref)))

    print("KERNEL_OK")
</pallas_src>

<mosaic_0001>
module attributes {stable_mosaic.version = 11 : i64} {
  func.func @_lstm_unit1_kernel(%arg0: i32, %arg1: memref<104x8xf32, #tpu.memory_space<vmem>>, %arg2: memref<8x8xf32, #tpu.memory_space<vmem>>, %arg3: memref<1x8xf32, #tpu.memory_space<vmem>>, %arg4: memref<24x104xf32, #tpu.memory_space<vmem>>, %arg5: memref<24x1xf32, #tpu.memory_space<vmem>>, %arg6: memref<24x8xf32, #tpu.memory_space<vmem>>) attributes {dimension_semantics = [#tpu.dimension_semantics<arbitrary>], iteration_bounds = array<i64: 1>, scalar_prefetch = 0 : i64, scratch_operands = 0 : i64, tpu.core_type = #tpu.core_type<tc>, window_params = [{pipeline_mode = #tpu.pipeline_mode<synchronous>, transform_indices = @transform_0, window_bounds = array<i64: 104, 8>}, {pipeline_mode = #tpu.pipeline_mode<synchronous>, transform_indices = @transform_1, window_bounds = array<i64: 8, 8>}, {pipeline_mode = #tpu.pipeline_mode<synchronous>, transform_indices = @transform_2, window_bounds = array<i64: 1, 8>}, {pipeline_mode = #tpu.pipeline_mode<synchronous>, transform_indices = @transform_3, window_bounds = array<i64: 24, 104>}, {pipeline_mode = #tpu.pipeline_mode<synchronous>, transform_indices = @transform_4, window_bounds = array<i64: 24, 1>}, {pipeline_mode = #tpu.pipeline_mode<synchronous>, transform_indices = @transform_5, window_bounds = array<i64: 24, 8>}]} {
    %c0 = arith.constant 0 : index
    %c0_0 = arith.constant 0 : index
    %0 = vector.load %arg1[%c0, %c0_0] : memref<104x8xf32, #tpu.memory_space<vmem>>, vector<104x8xf32>
    %c0_1 = arith.constant 0 : index
    %c0_2 = arith.constant 0 : index
    %1 = vector.load %arg2[%c0_1, %c0_2] : memref<8x8xf32, #tpu.memory_space<vmem>>, vector<8x8xf32>
    %cst = arith.constant dense<0.000000e+00> : vector<104x8xf32>
    %2 = tpu.matmul %0, %1, %cst {dimension_numbers = #tpu.dot_dimension_numbers<[1], [0], [0], [1], [0, 0, 1, 1], [], []>} : vector<104x8xf32>, vector<8x8xf32>, vector<104x8xf32> -> vector<104x8xf32>
    %c0_3 = arith.constant 0 : index
    %c0_4 = arith.constant 0 : index
    %3 = vector.load %arg3[%c0_3, %c0_4] : memref<1x8xf32, #tpu.memory_space<vmem>>, vector<1x8xf32>
    %4 = vector.broadcast %3 : vector<1x8xf32> to vector<104x8xf32>
    %5 = arith.addf %2, %4 : vector<104x8xf32>
    %c0_5 = arith.constant 0 : index
    %c0_6 = arith.constant 0 : index
    %6 = vector.load %arg4[%c0_5, %c0_6] : memref<24x104xf32, #tpu.memory_space<vmem>>, vector<24x104xf32>
    %cst_7 = arith.constant dense<0.000000e+00> : vector<24x8xf32>
    %7 = tpu.matmul %6, %5, %cst_7 {dimension_numbers = #tpu.dot_dimension_numbers<[1], [0], [0], [1], [0, 0, 1, 1], [], []>} : vector<24x104xf32>, vector<104x8xf32>, vector<24x8xf32> -> vector<24x8xf32>
    %c0_8 = arith.constant 0 : index
    %c0_9 = arith.constant 0 : index
    %8 = vector.load %arg5[%c0_8, %c0_9] : memref<24x1xf32, #tpu.memory_space<vmem>>, vector<24x1xf32>
    %9 = vector.broadcast %8 : vector<24x1xf32> to vector<24x8xf32>
    %10 = arith.addf %7, %9 : vector<24x8xf32>
    %c0_10 = arith.constant 0 : index
    %c0_11 = arith.constant 0 : index
    %11 = vector.load %arg6[%c0_10, %c0_11] : memref<24x8xf32, #tpu.memory_space<vmem>>, vector<24x8xf32>
    tpu.vector_store %arg6[%c0_10, %c0_11], %10 {strides = array<i32>} : memref<24x8xf32, #tpu.memory_space<vmem>>, vector<24x8xf32>,
    return
  }
  func.func @transform_0(%arg0: i32) -> (i32, i32) {
    %c0_i32 = arith.constant 0 : i32
    %c0_i32_0 = arith.constant 0 : i32
    %c0_i32_1 = arith.constant 0 : i32
    return %c0_i32, %c0_i32_0 : i32, i32
  }
  func.func @transform_1(%arg0: i32) -> (i32, i32) {
    %c0_i32 = arith.constant 0 : i32
    %c0_i32_0 = arith.constant 0 : i32
    %c0_i32_1 = arith.constant 0 : i32
    return %c0_i32, %c0_i32_0 : i32, i32
  }
  func.func @transform_2(%arg0: i32) -> (i32, i32) {
    %c0_i32 = arith.constant 0 : i32
    %c0_i32_0 = arith.constant 0 : i32
    %c0_i32_1 = arith.constant 0 : i32
    return %c0_i32, %c0_i32_0 : i32, i32
  }
  func.func @transform_3(%arg0: i32) -> (i32, i32) {
    %c0_i32 = arith.constant 0 : i32
    %c0_i32_0 = arith.constant 0 : i32
    %c0_i32_1 = arith.constant 0 : i32
    return %c0_i32, %c0_i32_0 : i32, i32
  }
  func.func @transform_4(%arg0: i32) -> (i32, i32) {
    %c0_i32 = arith.constant 0 : i32
    %c0_i32_0 = arith.constant 0 : i32
    %c0_i32_1 = arith.constant 0 : i32
    return %c0_i32, %c0_i32_0 : i32, i32
  }
  func.func @transform_5(%arg0: i32) -> (i32, i32) {
    %c0_i32 = arith.constant 0 : i32
    %c0_i32_0 = arith.constant 0 : i32
    %c0_i32_1 = arith.constant 0 : i32
    return %c0_i32, %c0_i32_0 : i32, i32
  }
}

</mosaic_0001>

<llo_original>
// kernel: lstm_unit1_forward.1
$region0: #{lstm_unit1_forward.1}
  #allocation0 [shape = 'u32[]', space=smem, size = 0x4, offset = 0x4, fixed_abs, tag = 'smem constant byte address 0x4 - core index']
  #allocation1 [shape = 'u32[144,128]{1,0:T(1,128)}', space=vmem, size = 0x12000, scoped, tag = 'internal scratch']
  %s0 = inlined_call_operand.vmem [shape: f32[104,8], index: 0, kind: input, shape index: {}]
  %s1 = inlined_call_operand.vmem [shape: f32[8,8], index: 1, kind: input, shape index: {}]
  %s2 = inlined_call_operand.vmem [shape: f32[1,8], index: 2, kind: input, shape index: {}]
  %s3 = inlined_call_operand.vmem [shape: f32[24,104], index: 3, kind: input, shape index: {}]
  %s4 = inlined_call_operand.vmem [shape: f32[24,1], index: 4, kind: input, shape index: {}]
  %s5 = inlined_call_operand.vmem [shape: f32[24,8], index: 5, kind: output, shape index: {}]
  %s6 = sld [smem:[#allocation0]]
  $region30: #{lstm_unit1_forward.1} parent=0
    _
  %s8 = ssub.s32 1, %s6
  %s9 = scalar_select 0, %s8, %s6
  // Predicated region
  $region2: #{lstm_unit1_forward.1} parent=0 // pred_check
    _
  $region3: #{lstm_unit1_forward.1} parent=0 // pred_check_branch
    %11 = sbr.rel (0) target = $region5
  $region4: #{lstm_unit1_forward.1} parent=0 // pred_region
    _
  $region5: #{lstm_unit1_forward.1} parent=0 // pred_fallthru
    _
  // Predicated region
  $region6: #{lstm_unit1_forward.1} parent=0 // pred_check
    _
  $region7: #{lstm_unit1_forward.1} parent=0 // pred_check_branch
    %13 = sbr.rel (0) target = $region9
  $region8: #{lstm_unit1_forward.1} parent=0 // pred_region
    _
  $region9: #{lstm_unit1_forward.1} parent=0 // pred_fallthru
    _
  // Predicated region
  $region10: #{lstm_unit1_forward.1} parent=0 // pred_check
    _
  $region11: #{lstm_unit1_forward.1} parent=0 // pred_check_branch
    %15 = sbr.rel (0) target = $region13
  $region12: #{lstm_unit1_forward.1} parent=0 // pred_region
    _
  $region13: #{lstm_unit1_forward.1} parent=0 // pred_fallthru
    _
  // Predicated region
  $region14: #{lstm_unit1_forward.1} parent=0 // pred_check
    _
  $region15: #{lstm_unit1_forward.1} parent=0 // pred_check_branch
    %17 = sbr.rel (0) target = $region17
  $region16: #{lstm_unit1_forward.1} parent=0 // pred_region
    _
  $region17: #{lstm_unit1_forward.1} parent=0 // pred_fallthru
    _
  // Predicated region
  $region18: #{lstm_unit1_forward.1} parent=0 // pred_check
    _
  $region19: #{lstm_unit1_forward.1} parent=0 // pred_check_branch
    %19 = sbr.rel (0) target = $region21
  $region20: #{lstm_unit1_forward.1} parent=0 // pred_region
    _
  $region21: #{lstm_unit1_forward.1} parent=0 // pred_fallthru
    _
  %v20 = vld [vmem:[%s0] sm:$0xff]
  %v21 = vld [vmem:[%s0 + $0x8] sm:$0xff]
  %v22 = vld [vmem:[%s0 + $0x10] sm:$0xff]
  %v23 = vld [vmem:[%s0 + $0x18] sm:$0xff]
  %v24 = vld [vmem:[%s0 + $0x20] sm:$0xff]
  %v25 = vld [vmem:[%s0 + $0x28] sm:$0xff]
  %v26 = vld [vmem:[%s0 + $0x30] sm:$0xff]
  %v27 = vld [vmem:[%s0 + $0x38] sm:$0xff]
  %v28 = vld [vmem:[%s0 + $0x40] sm:$0xff]
  %v29 = vld [vmem:[%s0 + $0x48] sm:$0xff]
  %v30 = vld [vmem:[%s0 + $0x50] sm:$0xff]
  %v31 = vld [vmem:[%s0 + $0x58] sm:$0xff]
  %v32 = vld [vmem:[%s0 + $0x60] sm:$0xff]
  %v33 = vld [vmem:[%s1] sm:$0xff]
  %v34 = vld [vmem:[%s2] sm:$0x1]
  %v36 = vlaneseq
  %v37 = vshrl.u32 %v36, 7
  %v38 = vsub.s32 0, %v37
  %v39 = vrot.slane %v34, %v38
  %vm41 = vcmask 64512
  %v43 = vsel %vm41, %v20, 0
  %v46 = vsel %vm41, %v21, 0
  %v49 = vsel %vm41, %v22, 0
  %v52 = vsel %vm41, %v23, 0
  %v55 = vsel %vm41, %v24, 0
  %v58 = vsel %vm41, %v25, 0
  %v61 = vsel %vm41, %v26, 0
  %v64 = vsel %vm41, %v27, 0
  %v67 = vsel %vm41, %v28, 0
  %v70 = vsel %vm41, %v29, 0
  %v73 = vsel %vm41, %v30, 0
  %v76 = vsel %vm41, %v31, 0
  %v79 = vsel %vm41, %v32, 0
  %81 = vmatprep.subr.mxu0 0.0
  %82 = vmatpush1.msra.mxu0 0.0
  %83 = vmatprep.subr.mxu0 0.0
  %84 = vmatpush1.msra.mxu0 0.0
  %85 = vmatprep.subr.mxu0 0.0
  %86 = vmatpush1.msra.mxu0 0.0
  %87 = vmatprep.subr.mxu0 0.0
  %88 = vmatpush1.msra.mxu0 0.0
  %89 = vmatprep.subr.mxu0 0.0
  %90 = vmatpush1.msra.mxu0 0.0
  %91 = vmatprep.subr.mxu0 0.0
  %92 = vmatpush1.msra.mxu0 0.0
  %93 = vmatprep.subr.mxu0 0.0
  %94 = vmatpush1.msra.mxu0 0.0
  %95 = vmatprep.subr.mxu0 0.0
  %96 = vmatpush1.msra.mxu0 0.0
  %97 = vmatprep.subr.mxu0 0.0
  %98 = vmatpush1.msra.mxu0 0.0
  %99 = vmatprep.subr.mxu0 0.0
  %100 = vmatpush1.msra.mxu0 0.0
  %101 = vmatprep.subr.mxu0 0.0
  %102 = vmatpush1.msra.mxu0 0.0
  %103 = vmatprep.subr.mxu0 0.0
  %104 = vmatpush1.msra.mxu0 0.0
  %105 = vmatprep.subr.mxu0 0.0
  %106 = vmatpush1.msra.mxu0 0.0
  %107 = vmatprep.subr.mxu0 0.0
  %108 = vmatpush1.msra.mxu0 0.0
  %109 = vmatprep.subr.mxu0 0.0
  %110 = vmatpush1.msra.mxu0 0.0
  %111 = vmatprep.subr.mxu0 0.0
  %112 = vmatpush1.msra.mxu0 %v33
  %113 = vmatprep.subr.mxu0 0.0
  %114 = vmatpush2.msra.mxu0 0.0
  %115 = vmatprep.subr.mxu0 0.0
  %116 = vmatpush2.msra.mxu0 0.0
  %117 = vmatprep.subr.mxu0 0.0
  %118 = vmatpush2.msra.mxu0 0.0
  %119 = vmatprep.subr.mxu0 0.0
  %120 = vmatpush2.msra.mxu0 0.0
  %121 = vmatprep.subr.mxu0 0.0
  %122 = vmatpush2.msra.mxu0 0.0
  %123 = vmatprep.subr.mxu0 0.0
  %124 = vmatpush2.msra.mxu0 0.0
  %125 = vmatprep.subr.mxu0 0.0
  %126 = vmatpush2.msra.mxu0 0.0
  %127 = vmatprep.subr.mxu0 0.0
  %128 = vmatpush2.msra.mxu0 0.0
  %129 = vmatprep.subr.mxu0 0.0
  %130 = vmatpush2.msra.mxu0 0.0
  %131 = vmatprep.subr.mxu0 0.0
  %132 = vmatpush2.msra.mxu0 0.0
  %133 = vmatprep.subr.mxu0 0.0
  %134 = vmatpush2.msra.mxu0 0.0
  %135 = vmatprep.subr.mxu0 0.0
  %136 = vmatpush2.msra.mxu0 0.0
  %137 = vmatprep.subr.mxu0 0.0
  %138 = vmatpush2.msra.mxu0 0.0
  %139 = vmatprep.subr.mxu0 0.0
  %140 = vmatpush2.msra.mxu0 0.0
  %141 = vmatprep.subr.mxu0 0.0
  %142 = vmatpush2.msra.mxu0 0.0
  %143 = vmatprep.subr.mxu0 0.0
  %144 = vmatpush2.msra.mxu0 0.0
  %145 = vmatprep.mubr.f32.mxu0 0.0
  %146 = vmatmul.mubr.f32.gmra.mxu0 %v43
  %v147 = vpop.f32.mrf.mxu0
  %v148 = vadd.f32 %v39, %v147
  %v149 = vpop.f32.mrf.mxu0
  %150 = vmatprep.mubr.f32.mxu0 0.0
  %151 = vmatmul.mubr.f32.gmra.mxu0 %v46
  %v152 = vpop.f32.mrf.mxu0
  %v153 = vadd.f32 %v39, %v152
  %v154 = vpop.f32.mrf.mxu0
  %155 = vmatprep.mubr.f32.mxu0 0.0
  %156 = vmatmul.mubr.f32.gmra.mxu0 %v49
  %v157 = vpop.f32.mrf.mxu0
  %v158 = vadd.f32 %v39, %v157
  %v159 = vpop.f32.mrf.mxu0
  %160 = vmatprep.mubr.f32.mxu0 0.0
  %161 = vmatmul.mubr.f32.gmra.mxu0 %v52
  %v162 = vpop.f32.mrf.mxu0
  %v163 = vadd.f32 %v39, %v162
  %v164 = vpop.f32.mrf.mxu0
  %165 = vmatprep.mubr.f32.mxu0 0.0
  %166 = vmatmul.mubr.f32.gmra.mxu0 %v55
  %v167 = vpop.f32.mrf.mxu0
  %v168 = vadd.f32 %v39, %v167
  %v169 = vpop.f32.mrf.mxu0
  %170 = vmatprep.mubr.f32.mxu0 0.0
  %171 = vmatmul.mubr.f32.gmra.mxu0 %v58
  %v172 = vpop.f32.mrf.mxu0
  %v173 = vadd.f32 %v39, %v172
  %v174 = vpop.f32.mrf.mxu0
  %175 = vmatprep.mubr.f32.mxu0 0.0
  %176 = vmatmul.mubr.f32.gmra.mxu0 %v61
  %v177 = vpop.f32.mrf.mxu0
  %v178 = vadd.f32 %v39, %v177
  %v179 = vpop.f32.mrf.mxu0
  %180 = vmatprep.mubr.f32.mxu0 0.0
  %181 = vmatmul.mubr.f32.gmra.mxu0 %v64
  %v182 = vpop.f32.mrf.mxu0
  %v183 = vadd.f32 %v39, %v182
  %v184 = vpop.f32.mrf.mxu0
  %185 = vmatprep.mubr.f32.mxu0 0.0
  %186 = vmatmul.mubr.f32.gmra.mxu0 %v67
  %v187 = vpop.f32.mrf.mxu0
  %v188 = vadd.f32 %v39, %v187
  %v189 = vpop.f32.mrf.mxu0
  %190 = vmatprep.mubr.f32.mxu0 0.0
  %191 = vmatmul.mubr.f32.gmra.mxu0 %v70
  %v192 = vpop.f32.mrf.mxu0
  %v193 = vadd.f32 %v39, %v192
  %v194 = vpop.f32.mrf.mxu0
  %195 = vmatprep.mubr.f32.mxu0 0.0
  %196 = vmatmul.mubr.f32.gmra.mxu0 %v73
  %v197 = vpop.f32.mrf.mxu0
  %v198 = vadd.f32 %v39, %v197
  %v199 = vpop.f32.mrf.mxu0
  %200 = vmatprep.mubr.f32.mxu0 0.0
  %201 = vmatmul.mubr.f32.gmra.mxu0 %v76
  %v202 = vpop.f32.mrf.mxu0
  %v203 = vadd.f32 %v39, %v202
  %v204 = vpop.f32.mrf.mxu0
  %205 = vmatprep.mubr.f32.mxu0 0.0
  %206 = vmatmul.mubr.f32.gmra.mxu0 %v79
  %v207 = vpop.f32.mrf.mxu0
  %v208 = vadd.f32 %v39, %v207
  %v209 = vpop.f32.mrf.mxu0
  %210 = vdwg.mxu0
  %v211 = vld [vmem:[%s3] sm:$0xff]
  %v212 = vld [vmem:[%s3 + $0x8] sm:$0xff]
  %v213 = vld [vmem:[%s3 + $0x10] sm:$0xff]
  %v214 = vld [vmem:[%s4] sm:$0xff]
  %v215 = vld [vmem:[%s4 + $0x8] sm:$0xff]
  %v216 = vld [vmem:[%s4 + $0x10] sm:$0xff]
  %218 = vset.pattern.permute.xlu0 0
  %219 = vperm.xlu0 %218, %v214
  %v220 = vpop.permute.xlu0 %219
  %223 = vset.pattern.permute.xlu0 0
  %224 = vperm.xlu0 %223, %v215
  %v225 = vpop.permute.xlu0 %224
  %228 = vset.pattern.permute.xlu0 0
  %229 = vperm.xlu0 %228, %v216
  %v230 = vpop.permute.xlu0 %229
  %vm232 = vcmask 850944
  %v234 = vsel %vm232, %v211, 0
  %v237 = vsel %vm232, %v212, 0
  %v240 = vsel %vm232, %v213, 0
  %242 = vmatprep.subr.mxu0 0.0
  %243 = vmatpush1.msra.mxu0 0.0
  %244 = vmatprep.subr.mxu0 0.0
  %245 = vmatpush1.msra.mxu0 0.0
  %246 = vmatprep.subr.mxu0 0.0
  %247 = vmatpush1.msra.mxu0 0.0
  %248 = vmatprep.subr.mxu0 0.0
  %249 = vmatpush1.msra.mxu0 %v208
  %250 = vmatprep.subr.mxu0 0.0
  %251 = vmatpush1.msra.mxu0 %v203
  %252 = vmatprep.subr.mxu0 0.0
  %253 = vmatpush1.msra.mxu0 %v198
  %254 = vmatprep.subr.mxu0 0.0
  %255 = vmatpush1.msra.mxu0 %v193
  %256 = vmatprep.subr.mxu0 0.0
  %257 = vmatpush1.msra.mxu0 %v188
  %258 = vmatprep.subr.mxu0 0.0
  %259 = vmatpush1.msra.mxu0 %v183
  %260 = vmatprep.subr.mxu0 0.0
  %261 = vmatpush1.msra.mxu0 %v178
  %262 = vmatprep.subr.mxu0 0.0
  %263 = vmatpush1.msra.mxu0 %v173
  %264 = vmatprep.subr.mxu0 0.0
  %265 = vmatpush1.msra.mxu0 %v168
  %266 = vmatprep.subr.mxu0 0.0
  %267 = vmatpush1.msra.mxu0 %v163
  %268 = vmatprep.subr.mxu0 0.0
  %269 = vmatpush1.msra.mxu0 %v158
  %270 = vmatprep.subr.mxu0 0.0
  %271 = vmatpush1.msra.mxu0 %v153
  %272 = vmatprep.subr.mxu0 0.0
  %273 = vmatpush1.msra.mxu0 %v148
  %274 = vmatprep.subr.mxu0 0.0
  %275 = vmatpush2.msra.mxu0 0.0
  %276 = vmatprep.subr.mxu0 0.0
  %277 = vmatpush2.msra.mxu0 0.0
  %278 = vmatprep.subr.mxu0 0.0
  %279 = vmatpush2.msra.mxu0 0.0
  %280 = vmatprep.subr.mxu0 0.0
  %281 = vmatpush2.msra.mxu0 0.0
  %282 = vmatprep.subr.mxu0 0.0
  %283 = vmatpush2.msra.mxu0 0.0
  %284 = vmatprep.subr.mxu0 0.0
  %285 = vmatpush2.msra.mxu0 0.0
  %286 = vmatprep.subr.mxu0 0.0
  %287 = vmatpush2.msra.mxu0 0.0
  %288 = vmatprep.subr.mxu0 0.0
  %289 = vmatpush2.msra.mxu0 0.0
  %290 = vmatprep.subr.mxu0 0.0
  %291 = vmatpush2.msra.mxu0 0.0
  %292 = vmatprep.subr.mxu0 0.0
  %293 = vmatpush2.msra.mxu0 0.0
  %294 = vmatprep.subr.mxu0 0.0
  %295 = vmatpush2.msra.mxu0 0.0
  %296 = vmatprep.subr.mxu0 0.0
  %297 = vmatpush2.msra.mxu0 0.0
  %298 = vmatprep.subr.mxu0 0.0
  %299 = vmatpush2.msra.mxu0 0.0
  %300 = vmatprep.subr.mxu0 0.0
  %301 = vmatpush2.msra.mxu0 0.0
  %302 = vmatprep.subr.mxu0 0.0
  %303 = vmatpush2.msra.mxu0 0.0
  %304 = vmatprep.subr.mxu0 0.0
  %305 = vmatpush2.msra.mxu0 0.0
  %306 = vmatprep.mubr.f32.mxu0 0.0
  %307 = vmatmul.mubr.f32.gmra.mxu0 %v234
  %v308 = vpop.f32.mrf.mxu0
  %v309 = vadd.f32 %v220, %v308
  %v310 = vpop.f32.mrf.mxu0
  %311 = vmatprep.mubr.f32.mxu0 0.0
  %312 = vmatmul.mubr.f32.gmra.mxu0 %v237
  %v313 = vpop.f32.mrf.mxu0
  %v314 = vadd.f32 %v225, %v313
  %v315 = vpop.f32.mrf.mxu0
  %316 = vmatprep.mubr.f32.mxu0 0.0
  %317 = vmatmul.mubr.f32.gmra.mxu0 %v240
  %v318 = vpop.f32.mrf.mxu0
  %v319 = vadd.f32 %v230, %v318
  %v320 = vpop.f32.mrf.mxu0
  %321 = vdwg.mxu0
  %322 = vst.msk [vmem:[%s5] sm:$0xff] %vm41, %v309
  %323 = vst.msk [vmem:[%s5 + $0x8] sm:$0xff] %vm41, %v314
  %324 = vst.msk [vmem:[%s5 + $0x10] sm:$0xff] %vm41, %v319
  // Predicated region
  $region22: #{lstm_unit1_forward.1} parent=0 // pred_check
    _
  $region23: #{lstm_unit1_forward.1} parent=0 // pred_check_branch
    %326 = sbr.rel (0) target = $region25
  $region24: #{lstm_unit1_forward.1} parent=0 // pred_region
    _
  $region25: #{lstm_unit1_forward.1} parent=0 // pred_fallthru
    _
  // Predicated region
  $region26: #{lstm_unit1_forward.1} parent=0 // pred_check
    _
  $region27: #{lstm_unit1_forward.1} parent=0 // pred_check_branch
    %328 = sbr.rel (0) target = $region29
  $region28: #{lstm_unit1_forward.1} parent=0 // pred_region
    _
  $region29: #{lstm_unit1_forward.1} parent=0 // pred_fallthru
    _

</llo_original>
